<compile_context>
chip_gen: v7x
topology: tpu7x:2x2x1
jax: 0.10.0
libtpu: 0.0.40
codegen_flags: <defaults>
</compile_context>

<pallas_src>
import jax
import jax.numpy as jnp
from jax.experimental import pallas as pl
from jax.experimental.pallas import tpu as pltpu

_DEFAULT_CLASS_TILE = 256                 # fills v6e/v7x 256x256 MXU columns
_VMEM_LIMIT_BYTES = 32 * 1024 * 1024      # explicit scoped-VMEM limit (safe on v5e/v6e/v7x)
_VMEM_TILE_BUDGET = 20 * 1024 * 1024      # headroom under the limit for all live buffers


def _round_up(x, m):
    return ((x + m - 1) // m) * m


def _device_kind():
    try:
        return jax.devices()[0].device_kind.lower()
    except Exception:
        return ""


def _default_class_tile():
    kind = _device_kind()
    # v5e MXU is 128x128 -> 128-wide class tiles already fill it; v6e/v7x are 2x256^2.
    return 128 if ("v5 lite" in kind or "v5e" in kind) else _DEFAULT_CLASS_TILE


def _default_block_m():
    kind = _device_kind()
    # v7x: 64 MiB physical / 32 MiB default scoped VMEM -> smaller batch tile.
    return 256 if ("v7" in kind or "tpu7" in kind) else 512


def _min_rows(dtype):
    # Sublane packing: 8 rows/vreg for 32-bit, 16 for bf16, 32 for int8/fp8.
    return {4: 8, 2: 16, 1: 32}.get(jnp.dtype(dtype).itemsize, 8)


def _classifier1_kernel(x_ref, wt_ref, b_ref, o_ref):
    # x_ref:  [tm, K]   batch tile (double-buffered, streamed over grid axis 0)
    # wt_ref: [K, tn]   class tile of the pre-transposed weight (grid axis 1)
    # b_ref:  [1, tn]   class tile of the bias
    # o_ref:  [tm, tn]  output tile
    acc = jnp.dot(x_ref[...], wt_ref[...], preferred_element_type=jnp.float32)
    acc = acc + b_ref[...].astype(jnp.float32)       # broadcast [1,tn] -> [tm,tn]
    o_ref[...] = acc.astype(o_ref.dtype)


def prepare_classifier1_params(weight, bias, class_tile=None):
    """One-time parameter prep (call at init, NOT per forward).

    weight: [num_classes, in_dim] (PyTorch nn.Linear layout); bias: [num_classes].
    Returns (wt [in_dim, Cp], bias2d [1, Cp]).  Cp == num_classes when
    num_classes <= class_tile (no padding, no output slice needed later),
    otherwise num_classes rounded up to a multiple of class_tile (lane-dense
    MXU tiles).  The contraction axis is deliberately left unpadded so the
    forward pass never pads the activations.
    """
    if class_tile is None:
        class_tile = _default_class_tile()
    C, K = weight.shape
    Cp = C if C <= class_tile else _round_up(C, class_tile)
    wt = weight.T
    b2 = bias.reshape(1, C)
    if Cp != C:
        wt = jnp.zeros((K, Cp), weight.dtype).at[:, :C].set(wt)
        b2 = jnp.zeros((1, Cp), bias.dtype).at[:, :C].set(b2)
    return wt, b2


def classifier1_forward(x, wt, bias2d, num_classes, *,
                        drop_rate=0.0, training=False,
                        block_m=None, class_tile=None, out_dtype=None):
    """Classifier1 forward: identity dropout + x @ W.T + b.

    x: [B, in_dim]; wt / bias2d come from prepare_classifier1_params.
    bf16 x / bf16 weight is recommended (full MXU rate, half the HBM traffic);
    the matmul always accumulates in f32.  out_dtype defaults to x.dtype.
    """
    # Dropout with the module default p=0.0 (or eval mode) is the identity.
    assert not (training and drop_rate > 0.0), (
        "training-mode dropout with p>0 not implemented")

    if block_m is None:
        block_m = _default_block_m()
    if class_tile is None:
        class_tile = _default_class_tile()
    if out_dtype is None:
        out_dtype = x.dtype

    B, K = x.shape
    Kw, Cp = wt.shape
    assert Kw == K, (Kw, K)

    # Class tiling: one tile when the (possibly unpadded) head is small,
    # otherwise class_tile-wide lane-dense tiles.
    tn = Cp if Cp <= class_tile else class_tile
    assert Cp % tn == 0
    n_n = Cp // tn

    # Batch tile: sublane-packed rows, capped by block_m, then shrunk so all
    # live VMEM buffers fit the budget on every generation.
    rows = _min_rows(x.dtype)
    tm = min(_round_up(block_m, rows), _round_up(B, rows))
    xb = jnp.dtype(x.dtype).itemsize
    wb = jnp.dtype(wt.dtype).itemsize
    ob = jnp.dtype(out_dtype).itemsize
    w_bufs = 1 if n_n == 1 else 2          # constant-index weight -> one buffer
    while tm > rows:
        est = 2 * tm * K * xb + w_bufs * K * tn * wb + 2 * tm * tn * ob
        if est <= _VMEM_TILE_BUDGET:
            break
        tm = max(rows, _round_up(tm // 2, rows))
    # TODO(synk): for extreme in_dim where K*tn alone blows the budget, add a K
    #             grid axis ("arbitrary", last) with an f32 VMEM accumulator.

    # v7x megacore: make sure the parallel grid has >= 2 steps so both
    # TensorCores get work (single-TC v5e/v6e unaffected).
    if n_n == 1 and B > rows and _round_up(B, tm) // tm < 2:
        tm = _round_up(pl.cdiv(B, 2), rows)

    Bp = _round_up(B, tm)
    n_m = Bp // tm

    # Contraction axis is never padded; only a ragged batch needs a cheap pad.
    if Bp != B:
        x = jnp.pad(x, ((0, Bp - B), (0, 0)))

    def _spec(shape, index_map, buffers=None):
        if buffers is None:
            return pl.BlockSpec(shape, index_map)
        return pl.BlockSpec(shape, index_map, pipeline_mode=pl.Buffered(buffers))

    def _call(single_buffer_w):
        wbuf = 1 if single_buffer_w else None
        return pl.pallas_call(
            _classifier1_kernel,
            out_shape=jax.ShapeDtypeStruct((Bp, Cp), out_dtype),
            grid_spec=pl.GridSpec(
                grid=(n_m, n_n),
                in_specs=[
                    _spec((tm, K), lambda i, j: (i, 0)),            # stream x tiles
                    _spec((K, tn), lambda i, j: (0, j), wbuf),      # weight class tiles
                    _spec((1, tn), lambda i, j: (0, j), wbuf),      # bias class tiles
                ],
                out_specs=pl.BlockSpec((tm, tn), lambda i, j: (i, j)),
            ),
            compiler_params=pltpu.CompilerParams(
                dimension_semantics=("parallel", "parallel"),
                vmem_limit_bytes=_VMEM_LIMIT_BYTES),
        )(x, wt, bias2d)

    if n_n == 1:
        # Weight/bias block index is constant across the whole grid: one VMEM
        # buffer suffices (halves their footprint; matters most on v7x).
        try:
            out = _call(True)
        except Exception:  # pipeline_mode unsupported -> default double-buffer
            out = _call(False)
    else:
        out = _call(False)

    # Slice only when something was actually padded (no extra HBM round trip in
    # the common case); consumers tolerant of padding can skip this and fuse.
    if Bp != B or Cp != num_classes:
        out = out[:B, :num_classes]
    return out


if __name__ == "__main__":
    # Small, module-consistent shapes: batch=8, in_dim=32, num_classes=2.
    # (At these sizes plain XLA would be cheaper than any Pallas launch; the
    #  kernel is structured for real batch / in_dim / class counts.)
    B, IN_DIM, NUM_CLASSES = 8, 32, 2

    key = jax.random.PRNGKey(0)
    kx, kw, kb = jax.random.split(key, 3)

    x = jax.random.normal(kx, (B, IN_DIM), dtype=jnp.float32)
    # Mimic nn.Linear uniform(-1/sqrt(in_dim), 1/sqrt(in_dim)) init.
    bound = 1.0 / (IN_DIM ** 0.5)
    weight = jax.random.uniform(kw, (NUM_CLASSES, IN_DIM), jnp.float32,
                                minval=-bound, maxval=bound)
    bias = jax.random.uniform(kb, (NUM_CLASSES,), jnp.float32,
                              minval=-bound, maxval=bound)

    # One-time parameter prep (transpose; class padding only if C > tile), then forward.
    wt_p, b_p = prepare_classifier1_params(weight, bias)
    out = classifier1_forward(x, wt_p, b_p, NUM_CLASSES,
                              drop_rate=0.0, training=False)
    out = jax.block_until_ready(out)

    # Sanity check against plain JAX reference.
    ref = x @ weight.T + bias
    assert out.shape == (B, NUM_CLASSES), out.shape
    assert jnp.allclose(out, ref, atol=1e-5, rtol=1e-5)

    print("KERNEL_OK")
</pallas_src>

<mosaic_0001>
module attributes {stable_mosaic.version = 11 : i64} {
  func.func @_classifier1_kernel(%arg0: i32, %arg1: i32, %arg2: memref<8x32xf32, #tpu.memory_space<vmem>>, %arg3: memref<32x2xf32, #tpu.memory_space<vmem>>, %arg4: memref<1x2xf32, #tpu.memory_space<vmem>>, %arg5: memref<8x2xf32, #tpu.memory_space<vmem>>) attributes {dimension_semantics = [#tpu.dimension_semantics<parallel>, #tpu.dimension_semantics<parallel>], iteration_bounds = array<i64: 1, 1>, scalar_prefetch = 0 : i64, scratch_operands = 0 : i64, tpu.core_type = #tpu.core_type<tc>, window_params = [{transform_indices = @transform_0, window_bounds = array<i64: 8, 32>}, {pipeline_mode = #tpu.pipeline_mode<synchronous>, transform_indices = @transform_1, window_bounds = array<i64: 32, 2>}, {pipeline_mode = #tpu.pipeline_mode<synchronous>, transform_indices = @transform_2, window_bounds = array<i64: 1, 2>}, {transform_indices = @transform_3, window_bounds = array<i64: 8, 2>}]} {
    %c0 = arith.constant 0 : index
    %c0_0 = arith.constant 0 : index
    %0 = vector.load %arg2[%c0, %c0_0] : memref<8x32xf32, #tpu.memory_space<vmem>>, vector<8x32xf32>
    %c0_1 = arith.constant 0 : index
    %c0_2 = arith.constant 0 : index
    %1 = vector.load %arg3[%c0_1, %c0_2] : memref<32x2xf32, #tpu.memory_space<vmem>>, vector<32x2xf32>
    %cst = arith.constant dense<0.000000e+00> : vector<8x2xf32>
    %2 = tpu.matmul %0, %1, %cst {dimension_numbers = #tpu.dot_dimension_numbers<[1], [0], [0], [1], [0, 0, 1, 1], [], []>} : vector<8x32xf32>, vector<32x2xf32>, vector<8x2xf32> -> vector<8x2xf32>
    %c0_3 = arith.constant 0 : index
    %c0_4 = arith.constant 0 : index
    %3 = vector.load %arg4[%c0_3, %c0_4] : memref<1x2xf32, #tpu.memory_space<vmem>>, vector<1x2xf32>
    %4 = vector.broadcast %3 : vector<1x2xf32> to vector<8x2xf32>
    %5 = arith.addf %2, %4 : vector<8x2xf32>
    %c0_5 = arith.constant 0 : index
    %c0_6 = arith.constant 0 : index
    %6 = vector.load %arg5[%c0_5, %c0_6] : memref<8x2xf32, #tpu.memory_space<vmem>>, vector<8x2xf32>
    tpu.vector_store %arg5[%c0_5, %c0_6], %5 {strides = array<i32>} : memref<8x2xf32, #tpu.memory_space<vmem>>, vector<8x2xf32>,
    return
  }
  func.func @transform_0(%arg0: i32, %arg1: i32) -> (i32, i32) {
    %c0_i32 = arith.constant 0 : i32
    %c0_i32_0 = arith.constant 0 : i32
    return %arg0, %c0_i32 : i32, i32
  }
  func.func @transform_1(%arg0: i32, %arg1: i32) -> (i32, i32) {
    %c0_i32 = arith.constant 0 : i32
    %c0_i32_0 = arith.constant 0 : i32
    return %c0_i32, %arg1 : i32, i32
  }
  func.func @transform_2(%arg0: i32, %arg1: i32) -> (i32, i32) {
    %c0_i32 = arith.constant 0 : i32
    %c0_i32_0 = arith.constant 0 : i32
    return %c0_i32, %arg1 : i32, i32
  }
  func.func @transform_3(%arg0: i32, %arg1: i32) -> (i32, i32) {
    %c0_i32 = arith.constant 0 : i32
    return %arg0, %arg1 : i32, i32
  }
}

module attributes {stable_mosaic.version = 11 : i64} {
  func.func @_classifier1_kernel(%arg0: i32, %arg1: i32, %arg2: memref<8x32xf32, #tpu.memory_space<vmem>>, %arg3: memref<32x2xf32, #tpu.memory_space<vmem>>, %arg4: memref<1x2xf32, #tpu.memory_space<vmem>>, %arg5: memref<8x2xf32, #tpu.memory_space<vmem>>) attributes {dimension_semantics = [#tpu.dimension_semantics<parallel>, #tpu.dimension_semantics<parallel>], iteration_bounds = array<i64: 1, 1>, scalar_prefetch = 0 : i64, scratch_operands = 0 : i64, tpu.core_type = #tpu.core_type<tc>, window_params = [{transform_indices = @transform_0, window_bounds = array<i64: 8, 32>}, {transform_indices = @transform_1, window_bounds = array<i64: 32, 2>}, {transform_indices = @transform_2, window_bounds = array<i64: 1, 2>}, {transform_indices = @transform_3, window_bounds = array<i64: 8, 2>}]} {
    %c0 = arith.constant 0 : index
    %c0_0 = arith.constant 0 : index
    %0 = vector.load %arg2[%c0, %c0_0] : memref<8x32xf32, #tpu.memory_space<vmem>>, vector<8x32xf32>
    %c0_1 = arith.constant 0 : index
    %c0_2 = arith.constant 0 : index
    %1 = vector.load %arg3[%c0_1, %c0_2] : memref<32x2xf32, #tpu.memory_space<vmem>>, vector<32x2xf32>
    %cst = arith.constant dense<0.000000e+00> : vector<8x2xf32>
    %2 = tpu.matmul %0, %1, %cst {dimension_numbers = #tpu.dot_dimension_numbers<[1], [0], [0], [1], [0, 0, 1, 1], [], []>} : vector<8x32xf32>, vector<32x2xf32>, vector<8x2xf32> -> vector<8x2xf32>
    %c0_3 = arith.constant 0 : index
    %c0_4 = arith.constant 0 : index
    %3 = vector.load %arg4[%c0_3, %c0_4] : memref<1x2xf32, #tpu.memory_space<vmem>>, vector<1x2xf32>
    %4 = vector.broadcast %3 : vector<1x2xf32> to vector<8x2xf32>
    %5 = arith.addf %2, %4 : vector<8x2xf32>
    %c0_5 = arith.constant 0 : index
    %c0_6 = arith.constant 0 : index
    %6 = vector.load %arg5[%c0_5, %c0_6] : memref<8x2xf32, #tpu.memory_space<vmem>>, vector<8x2xf32>
    tpu.vector_store %arg5[%c0_5, %c0_6], %5 {strides = array<i32>} : memref<8x2xf32, #tpu.memory_space<vmem>>, vector<8x2xf32>,
    return
  }
  func.func @transform_0(%arg0: i32, %arg1: i32) -> (i32, i32) {
    %c0_i32 = arith.constant 0 : i32
    %c0_i32_0 = arith.constant 0 : i32
    return %arg0, %c0_i32 : i32, i32
  }
  func.func @transform_1(%arg0: i32, %arg1: i32) -> (i32, i32) {
    %c0_i32 = arith.constant 0 : i32
    %c0_i32_0 = arith.constant 0 : i32
    return %c0_i32, %arg1 : i32, i32
  }
  func.func @transform_2(%arg0: i32, %arg1: i32) -> (i32, i32) {
    %c0_i32 = arith.constant 0 : i32
    %c0_i32_0 = arith.constant 0 : i32
    return %c0_i32, %arg1 : i32, i32
  }
  func.func @transform_3(%arg0: i32, %arg1: i32) -> (i32, i32) {
    %c0_i32 = arith.constant 0 : i32
    return %arg0, %arg1 : i32, i32
  }
}

</mosaic_0001>

<llo_original>
// kernel: tpu_custom_call.1
$region0: #{tpu_custom_call.1}
  #allocation0 [shape = 'u32[]', space=smem, size = 0x4, offset = 0x4, fixed_abs, tag = 'smem constant byte address 0x4 - core index']
  #allocation1 [shape = 'u32[144,128]{1,0:T(1,128)}', space=vmem, size = 0x12000, scoped, tag = 'internal scratch']
  %s0 = inlined_call_operand.vmem [shape: f32[8,32], index: 0, kind: input, shape index: {}]
  %s1 = inlined_call_operand.vmem [shape: f32[32,2], index: 1, kind: input, shape index: {}]
  %s2 = inlined_call_operand.vmem [shape: f32[1,2], index: 2, kind: input, shape index: {}]
  %s3 = inlined_call_operand.vmem [shape: f32[8,2], index: 3, kind: output, shape index: {}]
  %s4 = sld [smem:[#allocation0]]
  $region22: #{tpu_custom_call.1} parent=0
    _
  %s6 = ssub.s32 1, %s4
  %s7 = scalar_select 0, %s6, %s4
  // Predicated region
  $region2: #{tpu_custom_call.1} parent=0 // pred_check
    _
  $region3: #{tpu_custom_call.1} parent=0 // pred_check_branch
    %9 = sbr.rel (0) target = $region5
  $region4: #{tpu_custom_call.1} parent=0 // pred_region
    _
  $region5: #{tpu_custom_call.1} parent=0 // pred_fallthru
    _
  // Predicated region
  $region6: #{tpu_custom_call.1} parent=0 // pred_check
    _
  $region7: #{tpu_custom_call.1} parent=0 // pred_check_branch
    %11 = sbr.rel (0) target = $region9
  $region8: #{tpu_custom_call.1} parent=0 // pred_region
    _
  $region9: #{tpu_custom_call.1} parent=0 // pred_fallthru
    _
  // Predicated region
  $region10: #{tpu_custom_call.1} parent=0 // pred_check
    _
  $region11: #{tpu_custom_call.1} parent=0 // pred_check_branch
    %13 = sbr.rel (0) target = $region13
  $region12: #{tpu_custom_call.1} parent=0 // pred_region
    _
  $region13: #{tpu_custom_call.1} parent=0 // pred_fallthru
    _
  %v14 = vld [vmem:[%s0] sm:$0xff]
  %v15 = vld [vmem:[%s1] sm:$0xff]
  %v16 = vld [vmem:[%s1 + $0x8] sm:$0xff]
  %v17 = vld [vmem:[%s1 + $0x10] sm:$0xff]
  %v18 = vld [vmem:[%s1 + $0x18] sm:$0xff]
  %v19 = vld [vmem:[%s2] sm:$0x1]
  %v21 = vlaneseq
  %v22 = vshrl.u32 %v21, 7
  %v23 = vsub.s32 0, %v22
  %v24 = vrot.slane %v19, %v23
  %vm26 = vcmask 261120
  %v28 = vsel %vm26, %v14, 0
  %30 = vmatprep.subr.mxu0 0.0
  %31 = vmatpush1.msra.mxu0 %v15
  %32 = vmatprep.subr.mxu0 0.0
  %33 = vmatpush1.msra.mxu0 %v16
  %34 = vmatprep.subr.mxu0 0.0
  %35 = vmatpush1.msra.mxu0 %v17
  %36 = vmatprep.subr.mxu0 0.0
  %37 = vmatpush1.msra.mxu0 %v18
  %38 = vmatprep.subr.mxu0 0.0
  %39 = vmatpush1.msra.mxu0 0.0
  %40 = vmatprep.subr.mxu0 0.0
  %41 = vmatpush1.msra.mxu0 0.0
  %42 = vmatprep.subr.mxu0 0.0
  %43 = vmatpush1.msra.mxu0 0.0
  %44 = vmatprep.subr.mxu0 0.0
  %45 = vmatpush1.msra.mxu0 0.0
  %46 = vmatprep.subr.mxu0 0.0
  %47 = vmatpush1.msra.mxu0 0.0
  %48 = vmatprep.subr.mxu0 0.0
  %49 = vmatpush1.msra.mxu0 0.0
  %50 = vmatprep.subr.mxu0 0.0
  %51 = vmatpush1.msra.mxu0 0.0
  %52 = vmatprep.subr.mxu0 0.0
  %53 = vmatpush1.msra.mxu0 0.0
  %54 = vmatprep.subr.mxu0 0.0
  %55 = vmatpush1.msra.mxu0 0.0
  %56 = vmatprep.subr.mxu0 0.0
  %57 = vmatpush1.msra.mxu0 0.0
  %58 = vmatprep.subr.mxu0 0.0
  %59 = vmatpush1.msra.mxu0 0.0
  %60 = vmatprep.subr.mxu0 0.0
  %61 = vmatpush1.msra.mxu0 0.0
  %62 = vmatprep.subr.mxu0 0.0
  %63 = vmatpush1.msra.mxu0 0.0
  %64 = vmatprep.subr.mxu0 0.0
  %65 = vmatpush1.msra.mxu0 0.0
  %66 = vmatprep.subr.mxu0 0.0
  %67 = vmatpush1.msra.mxu0 0.0
  %68 = vmatprep.subr.mxu0 0.0
  %69 = vmatpush1.msra.mxu0 0.0
  %70 = vmatprep.subr.mxu0 0.0
  %71 = vmatpush1.msra.mxu0 0.0
  %72 = vmatprep.subr.mxu0 0.0
  %73 = vmatpush1.msra.mxu0 0.0
  %74 = vmatprep.subr.mxu0 0.0
  %75 = vmatpush1.msra.mxu0 0.0
  %76 = vmatprep.subr.mxu0 0.0
  %77 = vmatpush1.msra.mxu0 0.0
  %78 = vmatprep.subr.mxu0 0.0
  %79 = vmatpush1.msra.mxu0 0.0
  %80 = vmatprep.subr.mxu0 0.0
  %81 = vmatpush1.msra.mxu0 0.0
  %82 = vmatprep.subr.mxu0 0.0
  %83 = vmatpush1.msra.mxu0 0.0
  %84 = vmatprep.subr.mxu0 0.0
  %85 = vmatpush1.msra.mxu0 0.0
  %86 = vmatprep.subr.mxu0 0.0
  %87 = vmatpush1.msra.mxu0 0.0
  %88 = vmatprep.subr.mxu0 0.0
  %89 = vmatpush1.msra.mxu0 0.0
  %90 = vmatprep.subr.mxu0 0.0
  %91 = vmatpush1.msra.mxu0 0.0
  %92 = vmatprep.subr.mxu0 0.0
  %93 = vmatpush1.msra.mxu0 0.0
  %94 = vmatprep.mubr.f32.mxu0 0.0
  %95 = vmatmul.mubr.f32.gmra.mrb[0].mxu0 %v28
  %v96 = vpop.f32.mrb[0].mxu0
  %v97 = vadd.f32 %v24, %v96
  %v98 = vpop.f32.mrb[0].mxu0
  %99 = vdwg.mxu0
  %vm100 = vcmask 15360
  %101 = vst.msk [vmem:[%s3] sm:$0xff] %vm100, %v97
  // Predicated region
  $region14: #{tpu_custom_call.1} parent=0 // pred_check
    _
  $region15: #{tpu_custom_call.1} parent=0 // pred_check_branch
    %103 = sbr.rel (0) target = $region17
  $region16: #{tpu_custom_call.1} parent=0 // pred_region
    _
  $region17: #{tpu_custom_call.1} parent=0 // pred_fallthru
    _
  // Predicated region
  $region18: #{tpu_custom_call.1} parent=0 // pred_check
    _
  $region19: #{tpu_custom_call.1} parent=0 // pred_check_branch
    %105 = sbr.rel (0) target = $region21
  $region20: #{tpu_custom_call.1} parent=0 // pred_region
    _
  $region21: #{tpu_custom_call.1} parent=0 // pred_fallthru
    _

// kernel: tpu_custom_call.1
$region0: #{tpu_custom_call.1}
  #allocation0 [shape = 'u32[]', space=smem, size = 0x4, offset = 0x4, fixed_abs, tag = 'smem constant byte address 0x4 - core index']
  #allocation1 [shape = 'u32[144,128]{1,0:T(1,128)}', space=vmem, size = 0x12000, scoped, tag = 'internal scratch']
  %s0 = inlined_call_operand.vmem [shape: f32[8,32], index: 0, kind: input, shape index: {}]
  %s1 = inlined_call_operand.vmem [shape: f32[32,2], index: 1, kind: input, shape index: {}]
  %s2 = inlined_call_operand.vmem [shape: f32[1,2], index: 2, kind: input, shape index: {}]
  %s3 = inlined_call_operand.vmem [shape: f32[8,2], index: 3, kind: output, shape index: {}]
  %s4 = sld [smem:[#allocation0]]
  $region22: #{tpu_custom_call.1} parent=0
    _
  %s6 = ssub.s32 1, %s4
  %s7 = scalar_select 0, %s6, %s4
  // Predicated region
  $region2: #{tpu_custom_call.1} parent=0 // pred_check
    _
  $region3: #{tpu_custom_call.1} parent=0 // pred_check_branch
    %9 = sbr.rel (0) target = $region5
  $region4: #{tpu_custom_call.1} parent=0 // pred_region
    _
  $region5: #{tpu_custom_call.1} parent=0 // pred_fallthru
    _
  // Predicated region
  $region6: #{tpu_custom_call.1} parent=0 // pred_check
    _
  $region7: #{tpu_custom_call.1} parent=0 // pred_check_branch
    %11 = sbr.rel (0) target = $region9
  $region8: #{tpu_custom_call.1} parent=0 // pred_region
    _
  $region9: #{tpu_custom_call.1} parent=0 // pred_fallthru
    _
  // Predicated region
  $region10: #{tpu_custom_call.1} parent=0 // pred_check
    _
  $region11: #{tpu_custom_call.1} parent=0 // pred_check_branch
    %13 = sbr.rel (0) target = $region13
  $region12: #{tpu_custom_call.1} parent=0 // pred_region
    _
  $region13: #{tpu_custom_call.1} parent=0 // pred_fallthru
    _
  %v14 = vld [vmem:[%s0] sm:$0xff]
  %v15 = vld [vmem:[%s1] sm:$0xff]
  %v16 = vld [vmem:[%s1 + $0x8] sm:$0xff]
  %v17 = vld [vmem:[%s1 + $0x10] sm:$0xff]
  %v18 = vld [vmem:[%s1 + $0x18] sm:$0xff]
  %v19 = vld [vmem:[%s2] sm:$0x1]
  %v21 = vlaneseq
  %v22 = vshrl.u32 %v21, 7
  %v23 = vsub.s32 0, %v22
  %v24 = vrot.slane %v19, %v23
  %vm26 = vcmask 261120
  %v28 = vsel %vm26, %v14, 0
  %30 = vmatprep.subr.mxu0 0.0
  %31 = vmatpush1.msra.mxu0 %v15
  %32 = vmatprep.subr.mxu0 0.0
  %33 = vmatpush1.msra.mxu0 %v16
  %34 = vmatprep.subr.mxu0 0.0
  %35 = vmatpush1.msra.mxu0 %v17
  %36 = vmatprep.subr.mxu0 0.0
  %37 = vmatpush1.msra.mxu0 %v18
  %38 = vmatprep.subr.mxu0 0.0
  %39 = vmatpush1.msra.mxu0 0.0
  %40 = vmatprep.subr.mxu0 0.0
  %41 = vmatpush1.msra.mxu0 0.0
  %42 = vmatprep.subr.mxu0 0.0
  %43 = vmatpush1.msra.mxu0 0.0
  %44 = vmatprep.subr.mxu0 0.0
  %45 = vmatpush1.msra.mxu0 0.0
  %46 = vmatprep.subr.mxu0 0.0
  %47 = vmatpush1.msra.mxu0 0.0
  %48 = vmatprep.subr.mxu0 0.0
  %49 = vmatpush1.msra.mxu0 0.0
  %50 = vmatprep.subr.mxu0 0.0
  %51 = vmatpush1.msra.mxu0 0.0
  %52 = vmatprep.subr.mxu0 0.0
  %53 = vmatpush1.msra.mxu0 0.0
  %54 = vmatprep.subr.mxu0 0.0
  %55 = vmatpush1.msra.mxu0 0.0
  %56 = vmatprep.subr.mxu0 0.0
  %57 = vmatpush1.msra.mxu0 0.0
  %58 = vmatprep.subr.mxu0 0.0
  %59 = vmatpush1.msra.mxu0 0.0
  %60 = vmatprep.subr.mxu0 0.0
  %61 = vmatpush1.msra.mxu0 0.0
  %62 = vmatprep.subr.mxu0 0.0
  %63 = vmatpush1.msra.mxu0 0.0
  %64 = vmatprep.subr.mxu0 0.0
  %65 = vmatpush1.msra.mxu0 0.0
  %66 = vmatprep.subr.mxu0 0.0
  %67 = vmatpush1.msra.mxu0 0.0
  %68 = vmatprep.subr.mxu0 0.0
  %69 = vmatpush1.msra.mxu0 0.0
  %70 = vmatprep.subr.mxu0 0.0
  %71 = vmatpush1.msra.mxu0 0.0
  %72 = vmatprep.subr.mxu0 0.0
  %73 = vmatpush1.msra.mxu0 0.0
  %74 = vmatprep.subr.mxu0 0.0
  %75 = vmatpush1.msra.mxu0 0.0
  %76 = vmatprep.subr.mxu0 0.0
  %77 = vmatpush1.msra.mxu0 0.0
  %78 = vmatprep.subr.mxu0 0.0
  %79 = vmatpush1.msra.mxu0 0.0
  %80 = vmatprep.subr.mxu0 0.0
  %81 = vmatpush1.msra.mxu0 0.0
  %82 = vmatprep.subr.mxu0 0.0
  %83 = vmatpush1.msra.mxu0 0.0
  %84 = vmatprep.subr.mxu0 0.0
  %85 = vmatpush1.msra.mxu0 0.0
  %86 = vmatprep.subr.mxu0 0.0
  %87 = vmatpush1.msra.mxu0 0.0
  %88 = vmatprep.subr.mxu0 0.0
  %89 = vmatpush1.msra.mxu0 0.0
  %90 = vmatprep.subr.mxu0 0.0
  %91 = vmatpush1.msra.mxu0 0.0
  %92 = vmatprep.subr.mxu0 0.0
  %93 = vmatpush1.msra.mxu0 0.0
  %94 = vmatprep.mubr.f32.mxu0 0.0
  %95 = vmatmul.mubr.f32.gmra.mrb[0].mxu0 %v28
  %v96 = vpop.f32.mrb[0].mxu0
  %v97 = vadd.f32 %v24, %v96
  %v98 = vpop.f32.mrb[0].mxu0
  %99 = vdwg.mxu0
  %vm100 = vcmask 15360
  %101 = vst.msk [vmem:[%s3] sm:$0xff] %vm100, %v97
  // Predicated region
  $region14: #{tpu_custom_call.1} parent=0 // pred_check
    _
  $region15: #{tpu_custom_call.1} parent=0 // pred_check_branch
    %103 = sbr.rel (0) target = $region17
  $region16: #{tpu_custom_call.1} parent=0 // pred_region
    _
  $region17: #{tpu_custom_call.1} parent=0 // pred_fallthru
    _
  // Predicated region
  $region18: #{tpu_custom_call.1} parent=0 // pred_check
    _
  $region19: #{tpu_custom_call.1} parent=0 // pred_check_branch
    %105 = sbr.rel (0) target = $region21
  $region20: #{tpu_custom_call.1} parent=0 // pred_region
    _
  $region21: #{tpu_custom_call.1} parent=0 // pred_fallthru
    _

</llo_original>
